<compile_context>
chip_gen: v5e
topology: v5e:2x2
jax: 0.10.0
libtpu: 0.0.40
codegen_flags: <defaults>
</compile_context>

<pallas_src>
import jax
import jax.numpy as jnp
from jax.experimental import pallas as pl
from jax.experimental.pallas import tpu as pltpu


def _subject_kernel(x_ref, w_ref, b_ref, out_ref):
    # x_ref:   (TILE, p*H)   packed row tile of flattened bert outputs
    # w_ref:   (p*H, 2*p)    block-diagonal fused [heads | tails] weights (resident)
    # b_ref:   (1, 2*p)      fused biases, tiled p times (resident)
    # out_ref: (TILE, 2*p)   sigmoid(x @ W + b); unpacked to (N, 2) in wrapper
    z = jnp.dot(x_ref[...], w_ref[...], preferred_element_type=jnp.float32)
    out_ref[...] = jax.nn.sigmoid(z + b_ref[...]).astype(out_ref.dtype)


def subject_model_forward(bert_outputs, w_heads, b_heads, w_tails, b_tails,
                          *, max_tile_rows=2048, vmem_target_bytes=4 << 20):
    """bert_outputs: (B, S, H) float (f32 or bf16)
       w_heads / w_tails: (H,) ;  b_heads / b_tails: scalar ()
       Returns (sub_heads, sub_tails), each (B, S) float32."""
    B, S, H = bert_outputs.shape
    N = B * S
    x = bert_outputs.reshape(N, H)

    # Lane-packing factor: pack p rows per 128-lane vreg row when H divides 128.
    if H % 128 == 0:
        p = 1
    elif 128 % H == 0:
        p = 128 // H
    else:
        p = 1  # fall back to lane-padded layout

    # Fuse the two 1-wide projections: W = (H, 2), b = (1, 2), in f32.
    w2 = jnp.stack([w_heads, w_tails], axis=1).astype(jnp.float32)            # (H, 2)
    b2 = jnp.stack([jnp.asarray(b_heads), jnp.asarray(b_tails)]).reshape(1, 2)
    b2 = b2.astype(jnp.float32)
    if p > 1:
        wp = jnp.kron(jnp.eye(p, dtype=jnp.float32), w2)                      # (p*H, 2p)
        bp = jnp.tile(b2, (1, p))                                             # (1, 2p)
    else:
        wp, bp = w2, b2

    # Packed row count and tile size (multiple of 8 sublanes, ~4 MiB/buffer,
    # shrunk for tiny inputs so we do not over-pad).
    Np = pl.cdiv(N, p)
    row_bytes = p * H * jnp.dtype(x.dtype).itemsize
    tile = vmem_target_bytes // max(row_bytes, 1)
    tile = max(8, min(int(max_tile_rows), (tile // 8) * 8))
    tile = min(tile, max(8, ((Np + 7) // 8) * 8))

    Np_pad = pl.cdiv(Np, tile) * tile
    N_pad = Np_pad * p
    if N_pad != N:
        x = jnp.pad(x, ((0, N_pad - N), (0, 0)))
    xp = x.reshape(Np_pad, p * H)          # free reshape (row-major)

    grid = (Np_pad // tile,)

    out = pl.pallas_call(
        _subject_kernel,
        out_shape=jax.ShapeDtypeStruct((Np_pad, 2 * p), jnp.float32),
        grid=grid,
        in_specs=[
            # Row tile of packed x, pipelined (double-buffered) across the grid.
            pl.BlockSpec((tile, p * H), lambda i: (i, 0)),
            # Fused weights / bias: constant block index -> stay resident.
            pl.BlockSpec((p * H, 2 * p), lambda i: (0, 0)),
            pl.BlockSpec((1, 2 * p), lambda i: (0, 0)),
        ],
        out_specs=pl.BlockSpec((tile, 2 * p), lambda i: (i, 0)),
        compiler_params=pltpu.CompilerParams(
            dimension_semantics=("parallel",),  # shard rows across TCs on v7x
        ),
    )(xp, wp, bp)

    # Unpack: (Np_pad, 2p) -> (N_pad, 2), drop pad rows, split heads/tails.
    out = out.reshape(N_pad, 2)[:N]
    sub_heads = out[:, 0].reshape(B, S)    # torch.sigmoid(...).view(b, -1)
    sub_tails = out[:, 1].reshape(B, S)
    return sub_heads, sub_tails


def _reference(bert_outputs, w_heads, b_heads, w_tails, b_tails):
    h = jax.nn.sigmoid(jnp.einsum("bsh,h->bs", bert_outputs, w_heads) + b_heads)
    t = jax.nn.sigmoid(jnp.einsum("bsh,h->bs", bert_outputs, w_tails) + b_tails)
    return h, t


if __name__ == "__main__":
    # Small shapes consistent with the module: bert_feature_size = 32
    B, S, H = 2, 8, 32

    key = jax.random.PRNGKey(0)
    kx, kwh, kbh, kwt, kbt = jax.random.split(key, 5)

    bert_outputs = jax.random.normal(kx, (B, S, H), dtype=jnp.float32)

    # Deterministic Linear(H, 1) init (PyTorch-style uniform(-1/sqrt(H), 1/sqrt(H)))
    bound = 1.0 / (H ** 0.5)
    w_heads = jax.random.uniform(kwh, (H,), jnp.float32, -bound, bound)
    b_heads = jax.random.uniform(kbh, (), jnp.float32, -bound, bound)
    w_tails = jax.random.uniform(kwt, (H,), jnp.float32, -bound, bound)
    b_tails = jax.random.uniform(kbt, (), jnp.float32, -bound, bound)

    sub_heads, sub_tails = subject_model_forward(
        bert_outputs, w_heads, b_heads, w_tails, b_tails
    )
    jax.block_until_ready((sub_heads, sub_tails))

    ref_heads, ref_tails = _reference(bert_outputs, w_heads, b_heads, w_tails, b_tails)
    assert sub_heads.shape == (B, S) and sub_tails.shape == (B, S)
    assert jnp.allclose(sub_heads, ref_heads, atol=1e-5, rtol=1e-5)
    assert jnp.allclose(sub_tails, ref_tails, atol=1e-5, rtol=1e-5)

    print("KERNEL_OK")
</pallas_src>

<mosaic_0001>
module attributes {stable_mosaic.version = 11 : i64} {
  func.func @_subject_kernel(%arg0: i32, %arg1: memref<8x128xf32, #tpu.memory_space<vmem>>, %arg2: memref<128x8xf32, #tpu.memory_space<vmem>>, %arg3: memref<1x8xf32, #tpu.memory_space<vmem>>, %arg4: memref<8x8xf32, #tpu.memory_space<vmem>>) attributes {dimension_semantics = [#tpu.dimension_semantics<parallel>], iteration_bounds = array<i64: 1>, scalar_prefetch = 0 : i64, scratch_operands = 0 : i64, tpu.core_type = #tpu.core_type<tc>, window_params = [{transform_indices = @transform_0, window_bounds = array<i64: 8, 128>}, {pipeline_mode = #tpu.pipeline_mode<synchronous>, transform_indices = @transform_1, window_bounds = array<i64: 128, 8>}, {pipeline_mode = #tpu.pipeline_mode<synchronous>, transform_indices = @transform_2, window_bounds = array<i64: 1, 8>}, {transform_indices = @transform_3, window_bounds = array<i64: 8, 8>}]} {
    %c0 = arith.constant 0 : index
    %c0_0 = arith.constant 0 : index
    %0 = vector.load %arg1[%c0, %c0_0] : memref<8x128xf32, #tpu.memory_space<vmem>>, vector<8x128xf32>
    %c0_1 = arith.constant 0 : index
    %c0_2 = arith.constant 0 : index
    %1 = vector.load %arg2[%c0_1, %c0_2] : memref<128x8xf32, #tpu.memory_space<vmem>>, vector<128x8xf32>
    %cst = arith.constant dense<0.000000e+00> : vector<8x8xf32>
    %2 = tpu.matmul %0, %1, %cst {dimension_numbers = #tpu.dot_dimension_numbers<[1], [0], [0], [1], [0, 0, 1, 1], [], []>} : vector<8x128xf32>, vector<128x8xf32>, vector<8x8xf32> -> vector<8x8xf32>
    %c0_3 = arith.constant 0 : index
    %c0_4 = arith.constant 0 : index
    %3 = vector.load %arg3[%c0_3, %c0_4] : memref<1x8xf32, #tpu.memory_space<vmem>>, vector<1x8xf32>
    %4 = vector.broadcast %3 : vector<1x8xf32> to vector<8x8xf32>
    %5 = arith.addf %2, %4 : vector<8x8xf32>
    %6 = arith.negf %5 : vector<8x8xf32>
    %7 = math.exp %6 : vector<8x8xf32>
    %cst_5 = arith.constant 1.000000e+00 : f32
    %8 = vector.broadcast %cst_5 : f32 to vector<8x8xf32>
    %9 = arith.addf %8, %7 : vector<8x8xf32>
    %10 = arith.divf %8, %9 : vector<8x8xf32>
    %c0_6 = arith.constant 0 : index
    %c0_7 = arith.constant 0 : index
    %11 = vector.load %arg4[%c0_6, %c0_7] : memref<8x8xf32, #tpu.memory_space<vmem>>, vector<8x8xf32>
    tpu.vector_store %arg4[%c0_6, %c0_7], %10 {strides = array<i32>} : memref<8x8xf32, #tpu.memory_space<vmem>>, vector<8x8xf32>,
    return
  }
  func.func @transform_0(%arg0: i32) -> (i32, i32) {
    %c0_i32 = arith.constant 0 : i32
    %c0_i32_0 = arith.constant 0 : i32
    return %arg0, %c0_i32 : i32, i32
  }
  func.func @transform_1(%arg0: i32) -> (i32, i32) {
    %c0_i32 = arith.constant 0 : i32
    %c0_i32_0 = arith.constant 0 : i32
    %c0_i32_1 = arith.constant 0 : i32
    return %c0_i32, %c0_i32_0 : i32, i32
  }
  func.func @transform_2(%arg0: i32) -> (i32, i32) {
    %c0_i32 = arith.constant 0 : i32
    %c0_i32_0 = arith.constant 0 : i32
    %c0_i32_1 = arith.constant 0 : i32
    return %c0_i32, %c0_i32_0 : i32, i32
  }
  func.func @transform_3(%arg0: i32) -> (i32, i32) {
    %c0_i32 = arith.constant 0 : i32
    %c0_i32_0 = arith.constant 0 : i32
    return %arg0, %c0_i32 : i32, i32
  }
}

</mosaic_0001>

<llo_original>
// kernel: tpu_custom_call.1
$region0: #{tpu_custom_call.1}
  #allocation0 [shape = 'u32[]', space=smem, size = 0x4, offset = 0x4, fixed_abs, tag = 'smem constant byte address 0x4 - core index']
  #allocation1 [shape = 'u32[72,128]{1,0:T(1,128)}', space=vmem, size = 0x9000, scoped, tag = 'internal scratch']
  %s0 = inlined_call_operand.vmem [shape: f32[8,128], index: 0, kind: input, shape index: {}]
  %s1 = inlined_call_operand.vmem [shape: f32[128,8], index: 1, kind: input, shape index: {}]
  %s2 = inlined_call_operand.vmem [shape: f32[1,8], index: 2, kind: input, shape index: {}]
  %s3 = inlined_call_operand.hbm [shape: f32[8,8], index: 3, kind: output, shape index: {}]
  %s4 = sld [smem:[#allocation0]]
  $region22: #{tpu_custom_call.1} parent=0
    _
  %s6 = ssub.s32 1, %s4
  %s7 = scalar_select 0, %s6, %s4
  $region1: #{tpu_custom_call.1} parent=0
    #allocation2 [shape = 'u8[4096]{0}', space=vmem, size = 0x1000, scoped, tag = 'output window, operand 0, single buffered']
    #allocation3 [shape = 's32[1]{0}', space=sflag, size = 0x4, scoped, tag = 'scoped memory for tpu_custom_call.1']
    %8 = vsyncpa [#allocation3], 0
    // Predicated region
    $region2: #{tpu_custom_call.1} parent=1 // pred_check
      _
    $region3: #{tpu_custom_call.1} parent=1 // pred_check_branch
      %10 = sbr.rel (0) target = $region5
    $region4: #{tpu_custom_call.1} parent=1 // pred_region
      _
    $region5: #{tpu_custom_call.1} parent=1 // pred_fallthru
      _
    // Predicated region
    $region6: #{tpu_custom_call.1} parent=1 // pred_check
      _
    $region7: #{tpu_custom_call.1} parent=1 // pred_check_branch
      %12 = sbr.rel (0) target = $region9
    $region8: #{tpu_custom_call.1} parent=1 // pred_region
      _
    $region9: #{tpu_custom_call.1} parent=1 // pred_fallthru
      _
    // Predicated region
    $region10: #{tpu_custom_call.1} parent=1 // pred_check
      _
    $region11: #{tpu_custom_call.1} parent=1 // pred_check_branch
      %14 = sbr.rel (0) target = $region13
    $region12: #{tpu_custom_call.1} parent=1 // pred_region
      _
    $region13: #{tpu_custom_call.1} parent=1 // pred_fallthru
      _
    %v15 = vld [vmem:[%s0] sm:$0xff]
    %v16 = vld [vmem:[%s1] sm:$0xff]
    %v17 = vld [vmem:[%s1 + $0x8] sm:$0xff]
    %v18 = vld [vmem:[%s1 + $0x10] sm:$0xff]
    %v19 = vld [vmem:[%s1 + $0x18] sm:$0xff]
    %v20 = vld [vmem:[%s1 + $0x20] sm:$0xff]
    %v21 = vld [vmem:[%s1 + $0x28] sm:$0xff]
    %v22 = vld [vmem:[%s1 + $0x30] sm:$0xff]
    %v23 = vld [vmem:[%s1 + $0x38] sm:$0xff]
    %v24 = vld [vmem:[%s1 + $0x40] sm:$0xff]
    %v25 = vld [vmem:[%s1 + $0x48] sm:$0xff]
    %v26 = vld [vmem:[%s1 + $0x50] sm:$0xff]
    %v27 = vld [vmem:[%s1 + $0x58] sm:$0xff]
    %v28 = vld [vmem:[%s1 + $0x60] sm:$0xff]
    %v29 = vld [vmem:[%s1 + $0x68] sm:$0xff]
    %v30 = vld [vmem:[%s1 + $0x70] sm:$0xff]
    %v31 = vld [vmem:[%s1 + $0x78] sm:$0xff]
    %v32 = vld [vmem:[%s2] sm:$0x1]
    %v34 = vperm.slane %v32, 0
    %36 = vmatpush.msra.mxu0 %v31
    %37 = vmatpush.msra.mxu0 %v30
    %38 = vmatpush.msra.mxu0 %v29
    %39 = vmatpush.msra.mxu0 %v28
    %40 = vmatpush.msra.mxu0 %v27
    %41 = vmatpush.msra.mxu0 %v26
    %42 = vmatpush.msra.mxu0 %v25
    %43 = vmatpush.msra.mxu0 %v24
    %44 = vmatpush.msra.mxu0 %v23
    %45 = vmatpush.msra.mxu0 %v22
    %46 = vmatpush.msra.mxu0 %v21
    %47 = vmatpush.msra.mxu0 %v20
    %48 = vmatpush.msra.mxu0 %v19
    %49 = vmatpush.msra.mxu0 %v18
    %50 = vmatpush.msra.mxu0 %v17
    %51 = vmatpush.msra.mxu0 %v16
    %52 = vmatmul.f32.gmra.mxu0 %v15
    %v53 = vpop.f32.mrf.mxu0
    %v54 = vadd.f32 %v34, %v53
    %55 = vdwg.mxu0
    %v56 = vxor.u32 %v54, 2147483648
    %v57 = vmul.f32 %v56, 1.442695
    %v58 = vpow.pop %v57
    %v59 = vadd.f32 %v58, 1.0
    %v60 = vrcp.pop %v59
    %v61 = vmul.f32 %v59, %v60
    %v62 = vsub.f32 1.0, %v61
    %v63 = vmul.f32 %v60, %v62
    %v64 = vadd.f32 %v60, %v63
    %vm65 = vweird.f32 %v59
    %vm66 = vweird.f32 %v60
    %vm67 = vmor %vm65, %vm66
    %v68 = vsel %vm67, %v60, %v64
    %v69 = vand.u32 2147483647, %v59
    %vm70 = vcmp.eq.f32.partialorder %v69, 8.507059e+37
    %v71 = vand.u32 %v59, 2147483648
    %v72 = vor.u32 1.1754944e-38, %v71
    %v73 = vsel %vm70, %v72, %v68
    %v74 = vmul.f32 1.0, %v73
    %vm75 = vcmask 64512
    %76 = vst.msk [vmem:[#allocation2] sm:$0xff] %vm75, %v74
    // Predicated region
    $region14: #{tpu_custom_call.1} parent=1 // pred_check
      _
    $region15: #{tpu_custom_call.1} parent=1 // pred_check_branch
      %78 = sbr.rel (0) target = $region17
    $region16: #{tpu_custom_call.1} parent=1 // pred_region
      %80 = vsyncadd [#allocation3], 0
      %s82 = sshll.u32 [#allocation2], 4
      %s83 = int_to_ptr.vmem [resolvable:$true] %s82
      %s84 = sshll.u32 %s3, 4
      %s85 = int_to_ptr.hbm [resolvable:$true] %s84
      %87 = dma.vmem_to_hbm [thread:$0]  %s83, 128, %s85, [#allocation3]
    $region17: #{tpu_custom_call.1} parent=1 // pred_fallthru
      _
    // Predicated region
    $region18: #{tpu_custom_call.1} parent=1 // pred_check
      _
    $region19: #{tpu_custom_call.1} parent=1 // pred_check_branch
      %89 = sbr.rel (0) target = $region21
    $region20: #{tpu_custom_call.1} parent=1 // pred_region
      %91 = dma.done [#allocation3], 128
    $region21: #{tpu_custom_call.1} parent=1 // pred_fallthru
      _
    %92 = vsyncpa [#allocation3], 1

</llo_original>
